<compile_context>
chip_gen: v5e
topology: v5e:2x2
jax: 0.10.0
libtpu: 0.0.40
codegen_flags: <defaults>
</compile_context>

<pallas_src>
import math

import jax
import jax.numpy as jnp
from jax.experimental import pallas as pl
from jax.experimental.pallas import tpu as pltpu


# ------------------------------- Pallas kernel -------------------------------

def _layer_scale_kernel(x_ref, gamma_ref, o_ref):
    # x_ref: (tile_r, tile_c)   gamma_ref: (1, tile_c)
    # Pure VPU broadcast multiply; lane-dense, unmasked loads/stores.
    o_ref[...] = x_ref[...] * gamma_ref[...]


# ------------------------------- tile selection -------------------------------

_TARGET_TILE_BYTES = 2 << 20   # ~2 MiB blocks: measured 85%+ HBM-roofline band
_MIN_ROWS = 256                # keep >=256 sublane rows per block when possible


def _round_up(n, m):
    return -(-n // m) * m


def _choose_tiles(R, C_pad, itemsize):
    # dtype-aware sublane multiple (packed dtypes occupy 16/32 sublanes per vreg)
    sub = {1: 32, 2: 16}.get(itemsize, 8)

    # Column tile: full padded C unless a >=256-row tile would blow the byte
    # budget; then split C on a multiple-of-128 (lane-dense) boundary.
    if _MIN_ROWS * C_pad * itemsize <= 2 * _TARGET_TILE_BYTES:
        tile_c = C_pad
    else:
        tile_c = max(128, (_TARGET_TILE_BYTES // (_MIN_ROWS * itemsize)) // 128 * 128)
        tile_c = min(tile_c, C_pad)

    # Row tile: fill the byte budget, rounded to the sublane multiple, capped
    # by the sublane-rounded row count (never a block wider than needed).
    tile_r = _TARGET_TILE_BYTES // (tile_c * itemsize)
    tile_r = max(sub, (tile_r // sub) * sub)
    tile_r = min(tile_r, _round_up(R, sub))
    return tile_r, tile_c


# --------------------------------- wrapper -----------------------------------

def layer_scale(x, gamma, *, inplace=False, min_pallas_bytes=1 << 20):
    """LayerScale: y = x * gamma.  x: (..., C), gamma: (C,)."""
    orig_shape = x.shape
    C = orig_shape[-1]
    R = int(math.prod(orig_shape[:-1])) if len(orig_shape) > 1 else 1

    # Match the (low-precision) module behavior: gamma is applied in x's dtype.
    g = gamma.astype(x.dtype)
    itemsize = jnp.dtype(x.dtype).itemsize

    # Tiny tensors: launch/grid overhead dominates; let XLA fuse the multiply.
    if R * C * itemsize < min_pallas_bytes:
        return x * g

    C_pad = _round_up(C, 128)
    x2 = x.reshape(R, C)
    g2 = g.reshape(1, C)
    if C_pad != C:
        # Pad the channel axis so output stores stay lane-dense (unmasked vst).
        x2 = jnp.pad(x2, ((0, 0), (0, C_pad - C)))
        g2 = jnp.pad(g2, ((0, 0), (0, C_pad - C)))

    tile_r, tile_c = _choose_tiles(R, C_pad, itemsize)
    grid = (pl.cdiv(R, tile_r), pl.cdiv(C_pad, tile_c))

    # VMEM budget: double-buffered input + output tiles + gamma row + slack.
    tile_bytes = tile_r * tile_c * itemsize
    vmem_need = 4 * tile_bytes + 2 * tile_c * itemsize + (1 << 20)
    vmem_limit = int(min(48 << 20, max(2 * vmem_need, 16 << 20)))

    # PyTorch inplace=True path: donate the activation buffer to the output
    # (only when no padding was introduced so shapes/dtypes match exactly).
    aliases = {0: 0} if (inplace and C_pad == C) else {}

    out = pl.pallas_call(
        _layer_scale_kernel,
        out_shape=jax.ShapeDtypeStruct((R, C_pad), x.dtype),
        grid_spec=pltpu.PrefetchScalarGridSpec(
            num_scalar_prefetch=0,
            grid=grid,
            in_specs=[
                pl.BlockSpec((tile_r, tile_c), lambda i, j: (i, j)),  # activations
                pl.BlockSpec((1, tile_c), lambda i, j: (0, j)),       # gamma row
            ],
            out_specs=pl.BlockSpec((tile_r, tile_c), lambda i, j: (i, j)),
        ),
        compiler_params=pltpu.CompilerParams(
            dimension_semantics=("parallel", "parallel"),
            vmem_limit_bytes=vmem_limit,
        ),
        input_output_aliases=aliases,
    )(x2, g2)

    if C_pad != C:
        out = out[:, :C]
    return out.reshape(orig_shape)


# ------------------------------------ main ------------------------------------

if __name__ == "__main__":
    key = jax.random.PRNGKey(0)
    kx1, kx2, kx3, kx4, kg1, kg2, kg3 = jax.random.split(key, 7)
    init_values = 1e-5

    # 1) ViT-style small shape, default gamma init (force the Pallas path).
    B, N, C = 2, 16, 128
    x = jax.random.normal(kx1, (B, N, C), jnp.float32)
    gamma0 = init_values * jnp.ones((C,), jnp.float32)
    out0 = jax.block_until_ready(layer_scale(x, gamma0, min_pallas_bytes=0))
    assert out0.shape == (B, N, C)
    assert jnp.max(jnp.abs(out0 - x * gamma0)) < 1e-7, "mismatch (default gamma)"

    # 2) C not divisible by 128 and R not divisible by 8 (exercise padding + masked edge).
    B2, N2, C2 = 2, 197, 192
    x2 = jax.random.normal(kx2, (B2, N2, C2), jnp.float32)
    gamma1 = jax.random.normal(kg1, (C2,), jnp.float32)
    out1 = jax.block_until_ready(layer_scale(x2, gamma1, min_pallas_bytes=0))
    assert out1.shape == (B2, N2, C2)
    assert jnp.max(jnp.abs(out1 - x2 * gamma1)) < 1e-6, "mismatch (padded C)"

    # 3) bf16 activations (dtype-aware sublane alignment).
    B3, N3, C3 = 4, 64, 128
    x3 = jax.random.normal(kx3, (B3, N3, C3), jnp.bfloat16)
    gamma2 = jax.random.normal(kg2, (C3,), jnp.float32)
    out2 = jax.block_until_ready(layer_scale(x3, gamma2, min_pallas_bytes=0))
    ref2 = x3 * gamma2.astype(jnp.bfloat16)
    assert jnp.max(jnp.abs(out2.astype(jnp.float32) - ref2.astype(jnp.float32))) < 1e-2, \
        "mismatch (bf16)"

    # 4) Multi-step row grid with a ragged last block (cdiv grid masking).
    B4, N4, C4 = 33, 200, 128
    x4 = jax.random.normal(kx4, (B4, N4, C4), jnp.float32)
    gamma3 = jax.random.normal(kg3, (C4,), jnp.float32)
    out3 = jax.block_until_ready(layer_scale(x4, gamma3, min_pallas_bytes=0))
    assert jnp.max(jnp.abs(out3 - x4 * gamma3)) < 1e-6, "mismatch (ragged row grid)"

    # NOTE: PyTorch `inplace=True` is a buffer-aliasing detail; values are identical.
    # It is exposed via layer_scale(..., inplace=True) -> input_output_aliases={0: 0}.
    print("KERNEL_OK")
</pallas_src>

<mosaic_0001>
module attributes {stable_mosaic.version = 11 : i64} {
  func.func @_layer_scale_kernel(%arg0: i32, %arg1: i32, %arg2: memref<32x128xf32, #tpu.memory_space<vmem>>, %arg3: memref<1x128xf32, #tpu.memory_space<vmem>>, %arg4: memref<32x128xf32, #tpu.memory_space<vmem>>) attributes {dimension_semantics = [#tpu.dimension_semantics<parallel>, #tpu.dimension_semantics<parallel>], iteration_bounds = array<i64: 1, 1>, scalar_prefetch = 0 : i64, scratch_operands = 0 : i64, tpu.core_type = #tpu.core_type<tc>, window_params = [{transform_indices = @transform_0, window_bounds = array<i64: 32, 128>}, {transform_indices = @transform_1, window_bounds = array<i64: 1, 128>}, {transform_indices = @transform_2, window_bounds = array<i64: 32, 128>}]} {
    %c0 = arith.constant 0 : index
    %c0_0 = arith.constant 0 : index
    %0 = vector.load %arg2[%c0, %c0_0] : memref<32x128xf32, #tpu.memory_space<vmem>>, vector<32x128xf32>
    %c0_1 = arith.constant 0 : index
    %c0_2 = arith.constant 0 : index
    %1 = vector.load %arg3[%c0_1, %c0_2] : memref<1x128xf32, #tpu.memory_space<vmem>>, vector<1x128xf32>
    %2 = vector.broadcast %1 : vector<1x128xf32> to vector<32x128xf32>
    %3 = arith.mulf %0, %2 : vector<32x128xf32>
    %c0_3 = arith.constant 0 : index
    %c0_4 = arith.constant 0 : index
    %4 = vector.load %arg4[%c0_3, %c0_4] : memref<32x128xf32, #tpu.memory_space<vmem>>, vector<32x128xf32>
    tpu.vector_store %arg4[%c0_3, %c0_4], %3 {strides = array<i32>} : memref<32x128xf32, #tpu.memory_space<vmem>>, vector<32x128xf32>,
    return
  }
  func.func @transform_0(%arg0: i32, %arg1: i32) -> (i32, i32) {
    %c0_i32 = arith.constant 0 : i32
    return %arg0, %arg1 : i32, i32
  }
  func.func @transform_1(%arg0: i32, %arg1: i32) -> (i32, i32) {
    %c0_i32 = arith.constant 0 : i32
    %c0_i32_0 = arith.constant 0 : i32
    return %c0_i32, %arg1 : i32, i32
  }
  func.func @transform_2(%arg0: i32, %arg1: i32) -> (i32, i32) {
    %c0_i32 = arith.constant 0 : i32
    return %arg0, %arg1 : i32, i32
  }
}

</mosaic_0001>

<llo_original>
// kernel: tpu_custom_call.1
$region0: #{tpu_custom_call.1}
  #allocation0 [shape = 'u32[]', space=smem, size = 0x4, offset = 0x4, fixed_abs, tag = 'smem constant byte address 0x4 - core index']
  #allocation1 [shape = 'u32[72,128]{1,0:T(1,128)}', space=vmem, size = 0x9000, scoped, tag = 'internal scratch']
  %s0 = inlined_call_operand.hbm [shape: f32[32,128], index: 0, kind: input, shape index: {}]
  %s1 = inlined_call_operand.hbm [shape: f32[1,128], index: 1, kind: input, shape index: {}]
  %s2 = inlined_call_operand.hbm [shape: f32[32,128], index: 2, kind: output, shape index: {}]
  %s3 = sld [smem:[#allocation0]]
  $region26: #{tpu_custom_call.1} parent=0
    _
  %s5 = ssub.s32 1, %s3
  %s6 = scalar_select 0, %s5, %s3
  $region1: #{tpu_custom_call.1} parent=0
    #allocation2 [shape = 'u8[16384]{0}', space=vmem, size = 0x4000, scoped, tag = 'input window, operand 0, single buffered']
    #allocation3 [shape = 's32[1]{0}', space=sflag, size = 0x4, scoped, tag = 'scoped memory for tpu_custom_call.1']
    #allocation4 [shape = 's32[1]{0}', space=sflag, size = 0x4, scoped, tag = 'scoped memory for tpu_custom_call.1']
    #allocation5 [shape = 'u8[512]{0}', space=vmem, size = 0x400, scoped, tag = 'input window, operand 1, single buffered']
    #allocation6 [shape = 's32[1]{0}', space=sflag, size = 0x4, scoped, tag = 'scoped memory for tpu_custom_call.1']
    #allocation7 [shape = 'u8[16384]{0}', space=vmem, size = 0x4000, scoped, tag = 'output window, operand 0, single buffered']
    %7 = vsyncpa [#allocation3], 0
    %8 = vsyncpa [#allocation6], 0
    %9 = vsyncpa [#allocation4], 0
    // Predicated region
    $region2: #{tpu_custom_call.1} parent=1 // pred_check
      _
    $region3: #{tpu_custom_call.1} parent=1 // pred_check_branch
      %11 = sbr.rel (0) target = $region5
    $region4: #{tpu_custom_call.1} parent=1 // pred_region
      %13 = vsyncadd [#allocation3], 0
      %s14 = sshll.u32 %s0, 4
      %s15 = int_to_ptr.hbm [resolvable:$true] %s14
      %s16 = sshll.u32 [#allocation2], 4
      %s17 = int_to_ptr.vmem [resolvable:$true] %s16
      %22 = dma.hbm_to_vmem [thread:$0]  %s15, 512, %s17, [#allocation3], 128, 128, 8
    $region5: #{tpu_custom_call.1} parent=1 // pred_fallthru
      _
    // Predicated region
    $region6: #{tpu_custom_call.1} parent=1 // pred_check
      _
    $region7: #{tpu_custom_call.1} parent=1 // pred_check_branch
      %24 = sbr.rel (0) target = $region9
    $region8: #{tpu_custom_call.1} parent=1 // pred_region
      %26 = vsyncadd [#allocation6], 0
      %s28 = sshll.u32 %s1, 4
      %s29 = int_to_ptr.hbm [resolvable:$true] %s28
      %s30 = sshll.u32 [#allocation5], 4
      %s31 = int_to_ptr.vmem [resolvable:$true] %s30
      %33 = dma.hbm_to_vmem [thread:$0]  %s29, 16, %s31, [#allocation6]
    $region9: #{tpu_custom_call.1} parent=1 // pred_fallthru
      _
    // Predicated region
    $region10: #{tpu_custom_call.1} parent=1 // pred_check
      _
    $region11: #{tpu_custom_call.1} parent=1 // pred_check_branch
      %35 = sbr.rel (0) target = $region13
    $region12: #{tpu_custom_call.1} parent=1 // pred_region
      %37 = dma.done [#allocation3], 512
    $region13: #{tpu_custom_call.1} parent=1 // pred_fallthru
      _
    // Predicated region
    $region14: #{tpu_custom_call.1} parent=1 // pred_check
      _
    $region15: #{tpu_custom_call.1} parent=1 // pred_check_branch
      %39 = sbr.rel (0) target = $region17
    $region16: #{tpu_custom_call.1} parent=1 // pred_region
      %41 = dma.done [#allocation6], 16
    $region17: #{tpu_custom_call.1} parent=1 // pred_fallthru
      _
    %v42 = vld [vmem:[#allocation2] sm:$0xff]
    %v43 = vld [vmem:[#allocation2 + $0x8] sm:$0xff]
    %v44 = vld [vmem:[#allocation2 + $0x10] sm:$0xff]
    %v45 = vld [vmem:[#allocation2 + $0x18] sm:$0xff]
    %v46 = vld [vmem:[#allocation5] sm:$0x1]
    %v48 = vperm.slane %v46, 0
    %v50 = vmul.f32 %v42, %v48
    %v51 = vmul.f32 %v43, %v48
    %v52 = vmul.f32 %v44, %v48
    %v53 = vmul.f32 %v45, %v48
    %54 = vst [vmem:[#allocation7] sm:$0xff] %v50
    %55 = vst [vmem:[#allocation7 + $0x8] sm:$0xff] %v51
    %56 = vst [vmem:[#allocation7 + $0x10] sm:$0xff] %v52
    %57 = vst [vmem:[#allocation7 + $0x18] sm:$0xff] %v53
    // Predicated region
    $region18: #{tpu_custom_call.1} parent=1 // pred_check
      _
    $region19: #{tpu_custom_call.1} parent=1 // pred_check_branch
      %59 = sbr.rel (0) target = $region21
    $region20: #{tpu_custom_call.1} parent=1 // pred_region
      %61 = vsyncadd [#allocation4], 0
      %s62 = sshll.u32 [#allocation7], 4
      %s63 = int_to_ptr.vmem [resolvable:$true] %s62
      %s64 = sshll.u32 %s2, 4
      %s65 = int_to_ptr.hbm [resolvable:$true] %s64
      %70 = dma.vmem_to_hbm [thread:$0]  %s63, 512, %s65, [#allocation4], 128, 128, 8
    $region21: #{tpu_custom_call.1} parent=1 // pred_fallthru
      _
    // Predicated region
    $region22: #{tpu_custom_call.1} parent=1 // pred_check
      _
    $region23: #{tpu_custom_call.1} parent=1 // pred_check_branch
      %72 = sbr.rel (0) target = $region25
    $region24: #{tpu_custom_call.1} parent=1 // pred_region
      %74 = dma.done [#allocation4], 512
    $region25: #{tpu_custom_call.1} parent=1 // pred_fallthru
      _
    %75 = vsyncpa [#allocation3], 1
    %76 = vsyncpa [#allocation6], 1
    %77 = vsyncpa [#allocation4], 1

</llo_original>
